<compile_context>
chip_gen: v5e
topology: v5e:2x2
jax: 0.10.0
libtpu: 0.0.40
codegen_flags: <defaults>
</compile_context>

<pallas_src>
import jax
import jax.numpy as jnp
from jax.experimental import pallas as pl
from jax.experimental.pallas import tpu as pltpu


# ---------------------------------------------------------------------------
# Helpers
# ---------------------------------------------------------------------------
def _round_up(x: int, m: int) -> int:
    return ((x + m - 1) // m) * m


def _cdiv(x: int, m: int) -> int:
    return (x + m - 1) // m


def _sublane(dtype) -> int:
    # vreg sublane packing: 8 rows for 4-byte, 16 for 2-byte, 32 for 1-byte dtypes.
    size = jnp.dtype(dtype).itemsize
    if size >= 4:
        return 8
    if size == 2:
        return 16
    return 32


_TM_MAX = 512                   # batch-tile cap (used for VMEM budgeting too)
_TN_MAX = 512                   # class-tile cap (multiple of 128)
_VMEM_TILE_BUDGET = 40 << 20    # double-buffered tile budget (fits v7x 64 MiB phys)
_VMEM_LIMIT_CAP = 48 << 20      # explicit scoped-VMEM limit (< v7x physical)


# ---------------------------------------------------------------------------
# Kernels
# ---------------------------------------------------------------------------
def _linear_kernel_single_k(z_ref, wt_ref, b_ref, o_ref):
    # Fast path: all of D in one tile -> no accumulator round-trip, no pl.when.
    acc = jnp.dot(z_ref[...], wt_ref[...], preferred_element_type=jnp.float32)
    o_ref[...] = (acc + b_ref[...].astype(jnp.float32)).astype(o_ref.dtype)


def _linear_kernel_multi_k(z_ref, wt_ref, b_ref, o_ref, acc_ref):
    # General path: f32 VMEM accumulator resident across the (innermost) K axis.
    k = pl.program_id(2)

    @pl.when(k == 0)
    def _init():
        acc_ref[...] = jnp.zeros_like(acc_ref)

    acc_ref[...] += jnp.dot(
        z_ref[...], wt_ref[...], preferred_element_type=jnp.float32
    )

    @pl.when(k == pl.num_programs(2) - 1)
    def _finalize():
        # Bias only in the epilogue; K inner loop is a pure MXU accumulate.
        o_ref[...] = (acc_ref[...] + b_ref[...].astype(jnp.float32)).astype(o_ref.dtype)


# ---------------------------------------------------------------------------
# Wrapper: prepare params once, apply many times
# ---------------------------------------------------------------------------
def make_linear_classifier(W: jax.Array, b: jax.Array, *, tn: int | None = None,
                           tk: int | None = None):
    """Pre-transpose / pre-pad nn.Linear params once; returns apply(Z, tm=None)."""
    C, D = W.shape
    assert b.shape == (C,)
    w_item = jnp.dtype(W.dtype).itemsize
    b_item = jnp.dtype(b.dtype).itemsize

    # --- class tile: lane-dense (multiple of 128), balanced padding ---
    if tn is not None:
        TN = _round_up(tn, 128)
    else:
        n_n = max(1, _cdiv(C, _TN_MAX))
        TN = _round_up(_cdiv(C, n_n), 128)
    Cp = _cdiv(C, TN) * TN

    # --- reduction tile: cover all of D in one tile whenever the double-buffered
    #     tiles fit the VMEM budget (budgeted with the TM cap; actual TM <= cap) ---
    if tk is not None:
        TK = _round_up(tk, 128)
    else:
        fixed = 2 * (TN * b_item + _TM_MAX * TN * 4) + _TM_MAX * TN * 4
        per_k = 2 * (_TM_MAX * 4 + TN * w_item)       # worst-case 4B activations
        tk_cap = max(128, ((_VMEM_TILE_BUDGET - fixed) // per_k) // 128 * 128)
        tk_full = _round_up(D, 128)
        if tk_full <= tk_cap:
            TK = tk_full                               # single-K fast path
        else:
            n_k_tiles = _cdiv(D, tk_cap)
            TK = _round_up(_cdiv(D, n_k_tiles), 128)   # balanced K tiles
    Dp = _cdiv(D, TK) * TK
    n_k = Dp // TK

    # --- one-time weight transpose + zero padding (hoisted out of the hot path) ---
    Wt = W.T                                          # (D, C)
    if (Dp, Cp) != (D, C):
        Wt = jnp.pad(Wt, ((0, Dp - D), (0, Cp - C)))
    b2 = b.reshape(1, C)
    if Cp != C:
        b2 = jnp.pad(b2, ((0, 0), (0, Cp - C)))

    def apply(Z: jax.Array, *, tm: int | None = None) -> jax.Array:
        B, D_in = Z.shape
        assert D_in == D, "input_dim mismatch"
        z_item = jnp.dtype(Z.dtype).itemsize
        o_item = z_item
        sub = _sublane(Z.dtype)

        # --- batch tile: dtype-aware sublane rounding, balanced padding ---
        if tm is not None:
            TM = max(sub, _round_up(tm, sub))
        else:
            n_m_tiles = max(1, _cdiv(B, _TM_MAX))
            TM = _round_up(_cdiv(B, n_m_tiles), sub)
            # Megacore (v7x): avoid a single-step grid when the batch can be split.
            if Cp == TN and _cdiv(B, TM) == 1 and B >= 2 * sub:
                TM = _round_up(_cdiv(B, 2), sub)
        Bp = _cdiv(B, TM) * TM
        n_m = Bp // TM
        n_n = Cp // TN

        Zp = Z if (Bp == B and Dp == D) else jnp.pad(Z, ((0, Bp - B), (0, Dp - D)))

        # --- axis ordering: re-stream the cheaper operand (matters when n_k == 1,
        #     where the outer-axis operand stays VMEM-resident across the inner loop) ---
        z_bytes = Bp * Dp * z_item
        w_bytes = Dp * Cp * w_item
        classes_outer = (n_n * z_bytes + w_bytes) <= (z_bytes + n_m * w_bytes)

        single_k = (n_k == 1)

        if single_k:
            if classes_outer:
                grid = (n_n, n_m)
                z_map = lambda j, i: (i, 0)
                w_map = lambda j, i: (0, j)
                o_map = lambda j, i: (i, j)
            else:
                grid = (n_m, n_n)
                z_map = lambda i, j: (i, 0)
                w_map = lambda i, j: (0, j)
                o_map = lambda i, j: (i, j)
            b_map = w_map
            kernel = _linear_kernel_single_k
            scratch = []
            dims = ("parallel", "parallel")
        else:
            if classes_outer:
                grid = (n_n, n_m, n_k)
                z_map = lambda j, i, k: (i, k)
                w_map = lambda j, i, k: (k, j)
                b_map = lambda j, i, k: (0, j)
                o_map = lambda j, i, k: (i, j)
            else:
                grid = (n_m, n_n, n_k)
                z_map = lambda i, j, k: (i, k)
                w_map = lambda i, j, k: (k, j)
                b_map = lambda i, j, k: (0, j)
                o_map = lambda i, j, k: (i, j)
            kernel = _linear_kernel_multi_k
            scratch = [pltpu.VMEM((TM, TN), jnp.float32)]
            dims = ("parallel", "parallel", "arbitrary")

        in_specs = [
            pl.BlockSpec((TM, TK), z_map),   # activations
            pl.BlockSpec((TK, TN), w_map),   # pre-transposed weights
            pl.BlockSpec((1, TN), b_map),    # bias
        ]
        out_spec = pl.BlockSpec((TM, TN), o_map)

        # Explicit scoped-VMEM limit covering the double-buffered tiles (+acc).
        need = 2 * (TM * TK * z_item + TK * TN * w_item + TN * b_item + TM * TN * o_item)
        if not single_k:
            need += TM * TN * 4
        vmem_limit = int(min(max(need + (4 << 20), 16 << 20), _VMEM_LIMIT_CAP))

        # HBM traffic with the actual re-read factors & per-array itemsizes.
        if single_k:
            z_reads = n_n if classes_outer else 1
            w_reads = 1 if classes_outer else n_m
        else:
            z_reads, w_reads = n_n, n_m
        cost = pl.CostEstimate(
            flops=2 * B * D * C,
            transcendentals=0,
            bytes_accessed=int(
                z_reads * B * D * z_item + w_reads * C * D * w_item
                + C * b_item + B * C * o_item
            ),
        )

        out_padded = pl.pallas_call(
            kernel,
            out_shape=jax.ShapeDtypeStruct((Bp, Cp), Z.dtype),
            grid_spec=pltpu.PrefetchScalarGridSpec(
                num_scalar_prefetch=0,
                grid=grid,
                in_specs=in_specs,
                out_specs=out_spec,
                scratch_shapes=scratch,
            ),
            compiler_params=pltpu.CompilerParams(
                dimension_semantics=dims,
                vmem_limit_bytes=vmem_limit,
            ),
            cost_estimate=cost,
        )(Zp, Wt, b2)

        if Bp == B and Cp == C:
            return out_padded
        return out_padded[:B, :C]

    return apply


def linear_classifier(Z: jax.Array, W: jax.Array, b: jax.Array, *,
                      tm: int | None = None, tn: int | None = None,
                      tk: int | None = None) -> jax.Array:
    """One-shot convenience wrapper: Y = Z @ W.T + b."""
    return make_linear_classifier(W, b, tn=tn, tk=tk)(Z, tm=tm)


if __name__ == "__main__":
    # Small shapes consistent with LinearClassifier(input_dim, nb_classes).
    batch = 8
    input_dim = 32
    nb_classes = 16

    key = jax.random.PRNGKey(0)
    kz, kw, kb = jax.random.split(key, 3)

    # nn.Linear-style init: U(-1/sqrt(in), 1/sqrt(in))
    bound = 1.0 / (input_dim ** 0.5)
    W = jax.random.uniform(kw, (nb_classes, input_dim), jnp.float32, -bound, bound)
    b = jax.random.uniform(kb, (nb_classes,), jnp.float32, -bound, bound)
    Z = jax.random.normal(kz, (batch, input_dim), jnp.float32)

    # Prepared-params path (weight transpose/pad hoisted; applied twice, prepped once).
    classifier = make_linear_classifier(W, b)
    out = jax.block_until_ready(classifier(Z))
    ref = Z @ W.T + b
    assert out.shape == (batch, nb_classes)
    assert jnp.allclose(out, ref, atol=1e-5, rtol=1e-5)
    out_again = jax.block_until_ready(classifier(Z))
    assert jnp.allclose(out_again, ref, atol=1e-5, rtol=1e-5)

    # Also exercise the multi-(M, N, K)-tile accumulator path with forced small tiles.
    B2, D2, C2 = 16, 256, 192
    kz2, kw2, kb2 = jax.random.split(jax.random.PRNGKey(1), 3)
    bound2 = 1.0 / (D2 ** 0.5)
    W2 = jax.random.uniform(kw2, (C2, D2), jnp.float32, -bound2, bound2)
    b2 = jax.random.uniform(kb2, (C2,), jnp.float32, -bound2, bound2)
    Z2 = jax.random.normal(kz2, (B2, D2), jnp.float32)
    out2 = jax.block_until_ready(linear_classifier(Z2, W2, b2, tm=8, tn=128, tk=128))
    ref2 = Z2 @ W2.T + b2
    assert out2.shape == (B2, C2)
    assert jnp.allclose(out2, ref2, atol=1e-4, rtol=1e-4)

    print("KERNEL_OK")
</pallas_src>

<mosaic_0001>
module attributes {stable_mosaic.version = 11 : i64} {
  func.func @_linear_kernel_single_k(%arg0: i32, %arg1: i32, %arg2: memref<8x128xf32, #tpu.memory_space<vmem>>, %arg3: memref<128x128xf32, #tpu.memory_space<vmem>>, %arg4: memref<1x128xf32, #tpu.memory_space<vmem>>, %arg5: memref<8x128xf32, #tpu.memory_space<vmem>>) attributes {dimension_semantics = [#tpu.dimension_semantics<parallel>, #tpu.dimension_semantics<parallel>], iteration_bounds = array<i64: 1, 1>, scalar_prefetch = 0 : i64, scratch_operands = 0 : i64, tpu.core_type = #tpu.core_type<tc>, window_params = [{transform_indices = @transform_0, window_bounds = array<i64: 8, 128>}, {transform_indices = @transform_1, window_bounds = array<i64: 128, 128>}, {transform_indices = @transform_2, window_bounds = array<i64: 1, 128>}, {transform_indices = @transform_3, window_bounds = array<i64: 8, 128>}]} {
    %c0 = arith.constant 0 : index
    %c0_0 = arith.constant 0 : index
    %0 = vector.load %arg2[%c0, %c0_0] : memref<8x128xf32, #tpu.memory_space<vmem>>, vector<8x128xf32>
    %c0_1 = arith.constant 0 : index
    %c0_2 = arith.constant 0 : index
    %1 = vector.load %arg3[%c0_1, %c0_2] : memref<128x128xf32, #tpu.memory_space<vmem>>, vector<128x128xf32>
    %cst = arith.constant dense<0.000000e+00> : vector<8x128xf32>
    %2 = tpu.matmul %0, %1, %cst {dimension_numbers = #tpu.dot_dimension_numbers<[1], [0], [0], [1], [0, 0, 1, 1], [], []>} : vector<8x128xf32>, vector<128x128xf32>, vector<8x128xf32> -> vector<8x128xf32>
    %c0_3 = arith.constant 0 : index
    %c0_4 = arith.constant 0 : index
    %3 = vector.load %arg4[%c0_3, %c0_4] : memref<1x128xf32, #tpu.memory_space<vmem>>, vector<1x128xf32>
    %4 = vector.broadcast %3 : vector<1x128xf32> to vector<8x128xf32>
    %5 = arith.addf %2, %4 : vector<8x128xf32>
    %c0_5 = arith.constant 0 : index
    %c0_6 = arith.constant 0 : index
    %6 = vector.load %arg5[%c0_5, %c0_6] : memref<8x128xf32, #tpu.memory_space<vmem>>, vector<8x128xf32>
    tpu.vector_store %arg5[%c0_5, %c0_6], %5 {strides = array<i32>} : memref<8x128xf32, #tpu.memory_space<vmem>>, vector<8x128xf32>,
    return
  }
  func.func @transform_0(%arg0: i32, %arg1: i32) -> (i32, i32) {
    %c0_i32 = arith.constant 0 : i32
    %c0_i32_0 = arith.constant 0 : i32
    return %arg1, %c0_i32 : i32, i32
  }
  func.func @transform_1(%arg0: i32, %arg1: i32) -> (i32, i32) {
    %c0_i32 = arith.constant 0 : i32
    %c0_i32_0 = arith.constant 0 : i32
    return %c0_i32, %arg0 : i32, i32
  }
  func.func @transform_2(%arg0: i32, %arg1: i32) -> (i32, i32) {
    %c0_i32 = arith.constant 0 : i32
    %c0_i32_0 = arith.constant 0 : i32
    return %c0_i32, %arg0 : i32, i32
  }
  func.func @transform_3(%arg0: i32, %arg1: i32) -> (i32, i32) {
    %c0_i32 = arith.constant 0 : i32
    return %arg1, %arg0 : i32, i32
  }
}

</mosaic_0001>

<llo_original>
// kernel: tpu_custom_call.1
$region0: #{tpu_custom_call.1}
  #allocation0 [shape = 'u32[]', space=smem, size = 0x4, offset = 0x4, fixed_abs, tag = 'smem constant byte address 0x4 - core index']
  #allocation1 [shape = 'u32[72,128]{1,0:T(1,128)}', space=vmem, size = 0x9000, scoped, tag = 'internal scratch']
  %s0 = inlined_call_operand.hbm [shape: f32[8,128], index: 0, kind: input, shape index: {}]
  %s1 = inlined_call_operand.hbm [shape: f32[128,128], index: 1, kind: input, shape index: {}]
  %s2 = inlined_call_operand.vmem [shape: f32[1,128], index: 2, kind: input, shape index: {}]
  %s3 = inlined_call_operand.hbm [shape: f32[8,128], index: 3, kind: output, shape index: {}]
  %s4 = sld [smem:[#allocation0]]
  $region30: #{tpu_custom_call.1} parent=0
    _
  %s6 = ssub.s32 1, %s4
  %s7 = scalar_select 0, %s6, %s4
  $region1: #{tpu_custom_call.1} parent=0
    #allocation2 [shape = 'u8[4096]{0}', space=vmem, size = 0x1000, scoped, tag = 'input window, operand 0, single buffered']
    #allocation3 [shape = 's32[1]{0}', space=sflag, size = 0x4, scoped, tag = 'scoped memory for tpu_custom_call.1']
    #allocation4 [shape = 's32[1]{0}', space=sflag, size = 0x4, scoped, tag = 'scoped memory for tpu_custom_call.1']
    #allocation5 [shape = 'u8[65536]{0}', space=vmem, size = 0x10000, scoped, tag = 'input window, operand 1, single buffered']
    #allocation6 [shape = 's32[1]{0}', space=sflag, size = 0x4, scoped, tag = 'scoped memory for tpu_custom_call.1']
    #allocation7 [shape = 'u8[4096]{0}', space=vmem, size = 0x1000, scoped, tag = 'output window, operand 0, single buffered']
    %8 = vsyncpa [#allocation3], 0
    %9 = vsyncpa [#allocation6], 0
    %10 = vsyncpa [#allocation4], 0
    // Predicated region
    $region2: #{tpu_custom_call.1} parent=1 // pred_check
      _
    $region3: #{tpu_custom_call.1} parent=1 // pred_check_branch
      %12 = sbr.rel (0) target = $region5
    $region4: #{tpu_custom_call.1} parent=1 // pred_region
      %14 = vsyncadd [#allocation3], 0
      %s16 = sshll.u32 %s0, 4
      %s17 = int_to_ptr.hbm [resolvable:$true] %s16
      %s18 = sshll.u32 [#allocation2], 4
      %s19 = int_to_ptr.vmem [resolvable:$true] %s18
      %21 = dma.hbm_to_vmem [thread:$0]  %s17, 128, %s19, [#allocation3]
    $region5: #{tpu_custom_call.1} parent=1 // pred_fallthru
      _
    // Predicated region
    $region6: #{tpu_custom_call.1} parent=1 // pred_check
      _
    $region7: #{tpu_custom_call.1} parent=1 // pred_check_branch
      %23 = sbr.rel (0) target = $region9
    $region8: #{tpu_custom_call.1} parent=1 // pred_region
      %25 = vsyncadd [#allocation6], 0
      %s26 = sshll.u32 %s1, 4
      %s27 = int_to_ptr.hbm [resolvable:$true] %s26
      %s28 = sshll.u32 [#allocation5], 4
      %s29 = int_to_ptr.vmem [resolvable:$true] %s28
      %34 = dma.hbm_to_vmem [thread:$0]  %s27, 2048, %s29, [#allocation6], 128, 128, 8
    $region9: #{tpu_custom_call.1} parent=1 // pred_fallthru
      _
    // Predicated region
    $region10: #{tpu_custom_call.1} parent=1 // pred_check
      _
    $region11: #{tpu_custom_call.1} parent=1 // pred_check_branch
      %36 = sbr.rel (0) target = $region13
    $region12: #{tpu_custom_call.1} parent=1 // pred_region
      _
    $region13: #{tpu_custom_call.1} parent=1 // pred_fallthru
      _
    // Predicated region
    $region14: #{tpu_custom_call.1} parent=1 // pred_check
      _
    $region15: #{tpu_custom_call.1} parent=1 // pred_check_branch
      %38 = sbr.rel (0) target = $region17
    $region16: #{tpu_custom_call.1} parent=1 // pred_region
      %40 = dma.done [#allocation3], 128
    $region17: #{tpu_custom_call.1} parent=1 // pred_fallthru
      _
    // Predicated region
    $region18: #{tpu_custom_call.1} parent=1 // pred_check
      _
    $region19: #{tpu_custom_call.1} parent=1 // pred_check_branch
      %42 = sbr.rel (0) target = $region21
    $region20: #{tpu_custom_call.1} parent=1 // pred_region
      %44 = dma.done [#allocation6], 2048
    $region21: #{tpu_custom_call.1} parent=1 // pred_fallthru
      _
    %v45 = vld [vmem:[#allocation2] sm:$0xff]
    %v46 = vld [vmem:[#allocation5] sm:$0xff]
    %v47 = vld [vmem:[#allocation5 + $0x8] sm:$0xff]
    %v48 = vld [vmem:[#allocation5 + $0x10] sm:$0xff]
    %v49 = vld [vmem:[#allocation5 + $0x18] sm:$0xff]
    %v50 = vld [vmem:[#allocation5 + $0x20] sm:$0xff]
    %v51 = vld [vmem:[#allocation5 + $0x28] sm:$0xff]
    %v52 = vld [vmem:[#allocation5 + $0x30] sm:$0xff]
    %v53 = vld [vmem:[#allocation5 + $0x38] sm:$0xff]
    %v54 = vld [vmem:[#allocation5 + $0x40] sm:$0xff]
    %v55 = vld [vmem:[#allocation5 + $0x48] sm:$0xff]
    %v56 = vld [vmem:[#allocation5 + $0x50] sm:$0xff]
    %v57 = vld [vmem:[#allocation5 + $0x58] sm:$0xff]
    %v58 = vld [vmem:[#allocation5 + $0x60] sm:$0xff]
    %v59 = vld [vmem:[#allocation5 + $0x68] sm:$0xff]
    %v60 = vld [vmem:[#allocation5 + $0x70] sm:$0xff]
    %v61 = vld [vmem:[#allocation5 + $0x78] sm:$0xff]
    %v62 = vld [vmem:[%s2] sm:$0x1]
    %v64 = vperm.slane %v62, 0
    %66 = vmatpush.msra.mxu0 %v61
    %67 = vmatpush.msra.mxu0 %v60
    %68 = vmatpush.msra.mxu0 %v59
    %69 = vmatpush.msra.mxu0 %v58
    %70 = vmatpush.msra.mxu0 %v57
    %71 = vmatpush.msra.mxu0 %v56
    %72 = vmatpush.msra.mxu0 %v55
    %73 = vmatpush.msra.mxu0 %v54
    %74 = vmatpush.msra.mxu0 %v53
    %75 = vmatpush.msra.mxu0 %v52
    %76 = vmatpush.msra.mxu0 %v51
    %77 = vmatpush.msra.mxu0 %v50
    %78 = vmatpush.msra.mxu0 %v49
    %79 = vmatpush.msra.mxu0 %v48
    %80 = vmatpush.msra.mxu0 %v47
    %81 = vmatpush.msra.mxu0 %v46
    %82 = vmatmul.f32.gmra.mxu0 %v45
    %v83 = vpop.f32.mrf.mxu0
    %v84 = vadd.f32 %v64, %v83
    %85 = vdwg.mxu0
    %86 = vst [vmem:[#allocation7] sm:$0xff] %v84
    // Predicated region
    $region22: #{tpu_custom_call.1} parent=1 // pred_check
      _
    $region23: #{tpu_custom_call.1} parent=1 // pred_check_branch
      %88 = sbr.rel (0) target = $region25
    $region24: #{tpu_custom_call.1} parent=1 // pred_region
      %90 = vsyncadd [#allocation4], 0
      %s92 = sshll.u32 [#allocation7], 4
      %s93 = int_to_ptr.vmem [resolvable:$true] %s92
      %s94 = sshll.u32 %s3, 4
      %s95 = int_to_ptr.hbm [resolvable:$true] %s94
      %97 = dma.vmem_to_hbm [thread:$0]  %s93, 128, %s95, [#allocation4]
    $region25: #{tpu_custom_call.1} parent=1 // pred_fallthru
      _
    // Predicated region
    $region26: #{tpu_custom_call.1} parent=1 // pred_check
      _
    $region27: #{tpu_custom_call.1} parent=1 // pred_check_branch
      %99 = sbr.rel (0) target = $region29
    $region28: #{tpu_custom_call.1} parent=1 // pred_region
      %101 = dma.done [#allocation4], 128
    $region29: #{tpu_custom_call.1} parent=1 // pred_fallthru
      _
    %102 = vsyncpa [#allocation3], 1
    %103 = vsyncpa [#allocation6], 1
    %104 = vsyncpa [#allocation4], 1

</llo_original>
